<compile_context>
chip_gen: v7x
topology: tpu7x:2x2x1
jax: 0.10.0
libtpu: 0.0.40
codegen_flags: <defaults>
</compile_context>

<pallas_src>
import functools

import jax
import jax.numpy as jnp
from jax.experimental import pallas as pl
from jax.experimental.pallas import tpu as pltpu

_LANES = 128


def _layernorm_kernel(x_ref, o_ref, *, d_valid, n_pad):
    # x_ref: (B, R, 128) block — B whole samples, fully resident in VMEM.
    x = x_ref[...].astype(jnp.float32)

    # Pad region is zero-filled, so the raw sum is exact without a mask.
    s = jnp.sum(x, axis=(1, 2), keepdims=True)               # (B,1,1)
    mean = s / d_valid
    diff = x - mean

    ss = jnp.sum(diff * diff, axis=(1, 2), keepdims=True)    # (B,1,1)
    if n_pad:
        # Each zero-padded element contributes exactly mean^2 to ss; remove it
        # analytically instead of masking the whole slab.
        ss = ss - n_pad * mean * mean

    # Unbiased variance (Bessel), matching torch.std default.
    # (d_valid == 1 would divide by zero -> NaN, same as torch.)
    var = ss / (d_valid - 1)
    std = jnp.sqrt(var)

    # One reciprocal per sample (EUP); D multiplies instead of D divides (VPU).
    inv = pl.reciprocal(std + 1e-4, approx=False)
    o_ref[...] = (diff * inv).astype(o_ref.dtype)


def _device_vmem_budget():
    """Per-core VMEM capacity minus headroom (works on v5e/v6e 128MiB, v7x 64MiB)."""
    try:
        cap = int(pltpu.get_tpu_info().vmem_capacity_bytes)
    except Exception:  # pragma: no cover - conservative fallback
        cap = 64 * 1024 * 1024
    return max(16 * 1024 * 1024, cap - 16 * 1024 * 1024)


def _choose_block_batch(N, R, itemsize, vmem_budget):
    """Samples per grid step: ~1 MiB of input per block, grid >= 2, fits VMEM."""
    row_bytes = R * _LANES * itemsize
    B = max(1, (1 << 20) // max(1, row_bytes))   # target ~1 MiB input per step
    if N >= 2:
        B = min(B, N // 2)                       # keep both v7x TCs busy
    B = max(1, min(B, N))

    def resident(b):
        # (in + out) x 2 pipeline buffers at input dtype + ~3 live f32 temps.
        return 4 * b * row_bytes + 3 * b * R * _LANES * 4

    while B > 1 and resident(B) > vmem_budget:
        B //= 2
    while N % B != 0:                            # keep blocks full / grid exact
        B -= 1
    return B, resident(B)


def layer_norm(x):
    """x: (N, C, H, W) array. Returns (x - mean) / (std + 1e-4) per sample."""
    N, C, H, W = x.shape
    D = C * H * W
    itemsize = jnp.dtype(x.dtype).itemsize

    # Pad D up to a full vreg tile: sublane multiple is 8 for f32, 16 for bf16.
    sublanes = 8 * max(1, 4 // itemsize)
    tile = sublanes * _LANES
    Dp = ((D + tile - 1) // tile) * tile
    n_pad = Dp - D
    R = Dp // _LANES

    x2d = x.reshape(N, D)
    if n_pad:
        # TODO(synk): fold this pad (and the trailing slice) into a chunked-D
        # kernel pass to avoid the extra HBM read+write for ragged D.
        x2d = jnp.pad(x2d, ((0, 0), (0, n_pad)))
    x3d = x2d.reshape(N, R, _LANES)

    vmem_budget = _device_vmem_budget()
    B, resident = _choose_block_batch(N, R, itemsize, vmem_budget)
    vmem_limit = int(min(vmem_budget, max(16 * 1024 * 1024, 2 * resident)))

    kernel = functools.partial(_layernorm_kernel, d_valid=D, n_pad=n_pad)

    out3d = pl.pallas_call(
        kernel,
        out_shape=jax.ShapeDtypeStruct((N, R, _LANES), x.dtype),
        grid=(N // B,),
        in_specs=[pl.BlockSpec((B, R, _LANES), lambda i: (i, 0, 0))],
        out_specs=pl.BlockSpec((B, R, _LANES), lambda i: (i, 0, 0)),
        compiler_params=pltpu.CompilerParams(
            dimension_semantics=("parallel",),
            vmem_limit_bytes=vmem_limit,
        ),
        cost_estimate=pl.CostEstimate(
            flops=5 * N * Dp,
            transcendentals=2 * N,
            bytes_accessed=2 * N * Dp * itemsize,
        ),
    )(x3d)

    out2d = out3d.reshape(N, Dp)
    if n_pad:
        out2d = out2d[:, :D]
    return out2d.reshape(N, C, H, W)


def _reference(x):
    # Pure-JAX reference matching torch semantics (unbiased std, eps on std).
    mean = jnp.mean(x, axis=(1, 2, 3), keepdims=True)
    n = x.shape[1] * x.shape[2] * x.shape[3]
    var = jnp.sum((x - mean) ** 2, axis=(1, 2, 3), keepdims=True) / (n - 1)
    std = jnp.sqrt(var)
    return (x - mean) / (std + 1e-4)


if __name__ == "__main__":
    key = jax.random.PRNGKey(0)
    x = jax.random.normal(key, (2, 4, 16, 16), dtype=jnp.float32)

    out = layer_norm(x)
    out = jax.block_until_ready(out)

    ref = _reference(x)
    assert out.shape == x.shape
    assert jnp.allclose(out, ref, atol=1e-5, rtol=1e-5), "mismatch vs reference"

    print("KERNEL_OK")
</pallas_src>

<mosaic_0001>
module attributes {stable_mosaic.version = 11 : i64} {
  func.func @_layernorm_kernel(%arg0: i32, %arg1: memref<1x8x128xf32, #tpu.memory_space<vmem>>, %arg2: memref<1x8x128xf32, #tpu.memory_space<vmem>>) attributes {dimension_semantics = [#tpu.dimension_semantics<parallel>], iteration_bounds = array<i64: 2>, scalar_prefetch = 0 : i64, scratch_operands = 0 : i64, tpu.core_type = #tpu.core_type<tc>, window_params = [{transform_indices = @transform_0, window_bounds = array<i64: 1, 8, 128>}, {transform_indices = @transform_1, window_bounds = array<i64: 1, 8, 128>}]} {
    %c0 = arith.constant 0 : index
    %c0_0 = arith.constant 0 : index
    %c0_1 = arith.constant 0 : index
    %0 = vector.load %arg1[%c0, %c0_0, %c0_1] : memref<1x8x128xf32, #tpu.memory_space<vmem>>, vector<1x8x128xf32>
    %cst = arith.constant dense<0.000000e+00> : vector<1xf32>
    %1 = vector.multi_reduction <add>, %0, %cst [1, 2] : vector<1x8x128xf32> to vector<1xf32>
    %2 = vector.shape_cast %1 : vector<1xf32> to vector<1x1x1xf32>
    %cst_2 = arith.constant 1.024000e+03 : f32
    %3 = vector.broadcast %cst_2 : f32 to vector<1x1x1xf32>
    %4 = arith.divf %2, %3 : vector<1x1x1xf32>
    %5 = vector.broadcast %4 : vector<1x1x1xf32> to vector<1x8x128xf32>
    %6 = arith.subf %0, %5 : vector<1x8x128xf32>
    %7 = arith.mulf %6, %6 : vector<1x8x128xf32>
    %cst_3 = arith.constant dense<0.000000e+00> : vector<1xf32>
    %8 = vector.multi_reduction <add>, %7, %cst_3 [1, 2] : vector<1x8x128xf32> to vector<1xf32>
    %9 = vector.shape_cast %8 : vector<1xf32> to vector<1x1x1xf32>
    %cst_4 = arith.constant 1.023000e+03 : f32
    %10 = vector.broadcast %cst_4 : f32 to vector<1x1x1xf32>
    %11 = arith.divf %9, %10 : vector<1x1x1xf32>
    %12 = math.sqrt %11 : vector<1x1x1xf32>
    %cst_5 = arith.constant 9.99999974E-5 : f32
    %13 = vector.broadcast %cst_5 : f32 to vector<1x1x1xf32>
    %14 = arith.addf %12, %13 : vector<1x1x1xf32>
    %15 = tpu.reciprocal %14 : vector<1x1x1xf32> -> vector<1x1x1xf32>
    %16 = vector.broadcast %15 : vector<1x1x1xf32> to vector<1x8x128xf32>
    %17 = arith.mulf %6, %16 : vector<1x8x128xf32>
    %c0_6 = arith.constant 0 : index
    %c0_7 = arith.constant 0 : index
    %c0_8 = arith.constant 0 : index
    %18 = vector.load %arg2[%c0_6, %c0_7, %c0_8] : memref<1x8x128xf32, #tpu.memory_space<vmem>>, vector<1x8x128xf32>
    tpu.vector_store %arg2[%c0_6, %c0_7, %c0_8], %17 {strides = array<i32>} : memref<1x8x128xf32, #tpu.memory_space<vmem>>, vector<1x8x128xf32>,
    return
  }
  func.func @transform_0(%arg0: i32) -> (i32, i32, i32) {
    %c0_i32 = arith.constant 0 : i32
    %c0_i32_0 = arith.constant 0 : i32
    %c0_i32_1 = arith.constant 0 : i32
    return %arg0, %c0_i32, %c0_i32_0 : i32, i32, i32
  }
  func.func @transform_1(%arg0: i32) -> (i32, i32, i32) {
    %c0_i32 = arith.constant 0 : i32
    %c0_i32_0 = arith.constant 0 : i32
    %c0_i32_1 = arith.constant 0 : i32
    return %arg0, %c0_i32, %c0_i32_0 : i32, i32, i32
  }
}

</mosaic_0001>

<llo_original>
// kernel: tpu_custom_call.1
$region0: #{tpu_custom_call.1}
  #allocation0 [shape = 'u32[]', space=smem, size = 0x4, offset = 0x4, fixed_abs, tag = 'smem constant byte address 0x4 - core index']
  #allocation1 [shape = 'u32[144,128]{1,0:T(1,128)}', space=vmem, size = 0x12000, scoped, tag = 'internal scratch']
  %s0 = inlined_call_operand.hbm [shape: f32[2,8,128], index: 0, kind: input, shape index: {}]
  %s1 = inlined_call_operand.hbm [shape: f32[2,8,128], index: 1, kind: output, shape index: {}]
  %s2 = sld [smem:[#allocation0]]
  $region41: #{tpu_custom_call.1} parent=0
    _
  %s4 = ssub.s32 1, %s2
  %s5 = scalar_select 0, %s4, %s2
  $region1: #{tpu_custom_call.1} parent=0
    #allocation2 [shape = 'u8[8192]{0}', space=vmem, size = 0x2000, scoped, tag = 'input window, operand 0']
    #allocation3 [shape = 's32[2]{0}', space=sflag, size = 0x8, scoped, tag = 'scoped memory for tpu_custom_call.1']
    #allocation4 [shape = 's32[2]{0}', space=sflag, size = 0x8, scoped, tag = 'scoped memory for tpu_custom_call.1']
    #allocation5 [shape = 'u8[8192]{0}', space=vmem, size = 0x2000, scoped, tag = 'output window, operand 0']
    %6 = vsyncpa [#allocation3], 0
    %s7 = scalar_lea.sflag [#allocation3], 1
    %8 = vsyncpa %s7, 0
    %9 = vsyncpa [#allocation4], 0
    %s10 = scalar_lea.sflag [#allocation4], 1
    %11 = vsyncpa %s10, 0
    loop: start=0, step=1, limit=4
    $region2: #{tpu_custom_call.1} parent=1 // loop_pre_header
      _
    $region3: #{tpu_custom_call.1} parent=1 // loop_header
      %s13 = sphi 0, %s17
      %p14 = scmp.ge.s32.totalorder %s13, 4
      %s23 = sphi 0, %s25
      %s26 = sphi 0, %s23
      %s27 = sphi 0, %s26
      %s43 = sphi 0, %s27
      %s49 = sphi 0, %s51
      %s52 = sphi 0, %s49
      %s53 = sphi 0, %s52
      %s69 = sphi 0, %s53
    $region4: #{tpu_custom_call.1} parent=1 // loop_header_branch
      %16 = sbr.rel (%p14) target = $region8
    $region5: #{tpu_custom_call.1} parent=1 // loop_body
      %s18 = ssub.s32 %s13, 1
      %s19 = ssub.s32 %s13, 2
      %s20 = sadd.s32 %s13, 1
      %s21 = ssub.s32 %s13, %s20
      %p22 = scmp.eq.s32.totalorder %s21, 0
      %s24 = sadd.s32 %s23, 1
      %s25 = scalar_select %p22, %s23, %s24
      %p28 = pneg %p22
      %p29 = scmp.eq.s32.totalorder %s13, 1
      %p30 = por %p28, %p29
      %p31 = scmp.ne.s32.totalorder %s23, %s26
      %p32 = scmp.eq.s32.totalorder %s13, 0
      %p33 = por %p31, %p32
      %p34 = scmp.ne.s32.totalorder %s23, %s26
      %p35 = scmp.eq.s32.totalorder %s18, 1
      %p36 = por %p34, %p35
      %p37 = scmp.ne.s32.totalorder %s26, %s27
      %p38 = scmp.eq.s32.totalorder %s18, 0
      %p39 = por %p37, %p38
      %p40 = scmp.ne.s32.totalorder %s26, %s27
      %p41 = scmp.eq.s32.totalorder %s19, 1
      %p42 = por %p40, %p41
      %p44 = scmp.ne.s32.totalorder %s27, %s43
      %p45 = scmp.eq.s32.totalorder %s19, 0
      %p46 = por %p44, %p45
      %s47 = ssub.s32 %s13, %s20
      %p48 = scmp.eq.s32.totalorder %s47, 0
      %s50 = sadd.s32 %s49, 1
      %s51 = scalar_select %p48, %s49, %s50
      %p54 = pneg %p48
      %p55 = scmp.eq.s32.totalorder %s13, 1
      %p56 = por %p54, %p55
      %p57 = scmp.ne.s32.totalorder %s49, %s52
      %p58 = scmp.eq.s32.totalorder %s13, 0
      %p59 = por %p57, %p58
      %p60 = scmp.ne.s32.totalorder %s49, %s52
      %p61 = scmp.eq.s32.totalorder %s18, 1
      %p62 = por %p60, %p61
      %p63 = scmp.ne.s32.totalorder %s52, %s53
      %p64 = scmp.eq.s32.totalorder %s18, 0
      %p65 = por %p63, %p64
      %p66 = scmp.ne.s32.totalorder %s52, %s53
      %p67 = scmp.eq.s32.totalorder %s19, 1
      %p68 = por %p66, %p67
      %p70 = scmp.ne.s32.totalorder %s53, %s69
      %p71 = scmp.eq.s32.totalorder %s19, 0
      %p72 = por %p70, %p71
      %p73 = scmp.le.s32.totalorder 1, %s13
      %p74 = scmp.lt.s32.totalorder %s13, 3
      %p75 = pnand %p73, %p74
      %p76 = pneg %p75
      // Predicated region
      $region9: #{tpu_custom_call.1} parent=5 // pred_check
        _
      $region10: #{tpu_custom_call.1} parent=5 // pred_check_branch
        %78 = sbr.rel (%p75) target = $region12
      $region11: #{tpu_custom_call.1} parent=5 // pred_region
        %s79 = ssub.s32 %s13, 1
      $region12: #{tpu_custom_call.1} parent=5 // pred_fallthru
        _
      %p80 = scmp.lt.s32.totalorder %s13, 2
      // Predicated region
      $region13: #{tpu_custom_call.1} parent=5 // pred_check
        %p81 = pneg %p80
      $region14: #{tpu_custom_call.1} parent=5 // pred_check_branch
        %83 = sbr.rel (%p81) target = $region16
      $region15: #{tpu_custom_call.1} parent=5 // pred_region
        // Predicated region
        $region17: #{tpu_custom_call.1} parent=15 // pred_check
          %p84 = pneg %p33
        $region18: #{tpu_custom_call.1} parent=15 // pred_check_branch
          %86 = sbr.rel (%p84) target = $region20
        $region19: #{tpu_custom_call.1} parent=15 // pred_region
          %s87 = sand.u32 %s23, 1
          %s88 = scalar_lea.sflag [#allocation3], %s87
          %s89 = sand.u32 %s23, 1
          %s90 = smul.addr %s89, 8
          %s91 = scalar_lea.vmem [#allocation2], %s90
          %s93 = ssub.s32 128, 128
          %94 = vsyncadd %s88, %s93
          %s95 = smul.addr %s13, 128
          %s96 = scalar_lea.hbm %s0, %s95
          %s98 = sshll.u32 %s91, 4
          %s99 = int_to_ptr.vmem [resolvable:$true] %s98
          %101 = dma.hbm_to_vmem [thread:$0]  %s96, 128, %s99, %s88
        $region20: #{tpu_custom_call.1} parent=15 // pred_fallthru
          _
      $region16: #{tpu_custom_call.1} parent=5 // pred_fallthru
        _
      %p102 = scmp.le.s32.totalorder 1, %s13
      %p103 = scmp.lt.s32.totalorder %s13, 3
      %p104 = pnand %p102, %p103
      %p105 = pneg %p104
      // Predicated region
      $region21: #{tpu_custom_call.1} parent=5 // pred_check
        _
      $region22: #{tpu_custom_call.1} parent=5 // pred_check_branch
        %107 = sbr.rel (%p104) target = $region24
      $region23: #{tpu_custom_call.1} parent=5 // pred_region
        %s108 = ssub.s32 %s13, 1
        %s109 = sand.u32 %s26, 1
        %s110 = scalar_lea.sflag [#allocation3], %s109
        %s111 = sand.u32 %s26, 1
        %s112 = smul.addr %s111, 8
        %s113 = scalar_lea.vmem [#allocation2], %s112
        // Predicated region
        $region25: #{tpu_custom_call.1} parent=23 // pred_check
          %p114 = pneg %p39
        $region26: #{tpu_custom_call.1} parent=23 // pred_check_branch
          %116 = sbr.rel (%p114) target = $region28
        $region27: #{tpu_custom_call.1} parent=23 // pred_region
          %117 = dma.done %s110, 128
        $region28: #{tpu_custom_call.1} parent=23 // pred_fallthru
          _
        %s118 = sand.u32 %s26, 1
        %s119 = scalar_lea.sflag [#allocation3], %s118
        %s120 = sand.u32 %s26, 1
        %s121 = smul.addr %s120, 8
        %s122 = scalar_lea.vmem [#allocation2], %s121
        %p123 = pneg %p39
        %p124 = pneg %p36
        %p125 = pneg %p65
        %p126 = pneg %p62
        %s127 = sand.u32 %s52, 1
        %s128 = scalar_lea.sflag [#allocation4], %s127
        %s129 = sand.u32 %s52, 1
        %s130 = smul.addr %s129, 8
        %s131 = scalar_lea.vmem [#allocation5], %s130
        %v132 = vld [vmem:[%s113] sm:$0xff]
        %133 = vadd.xlane.f32.xlu0 %v132
        %v134 = vpop.xlane.xlu0 %133
        %v135 = vrot.slane %v134, 4
        %v136 = vadd.f32 %v134, %v135
        %v137 = vrot.slane %v136, 2
        %v138 = vadd.f32 %v136, %v137
        %v139 = vrot.slane %v138, 1
        %v140 = vadd.f32 %v138, %v139
        %v141 = vrcp.pop 1024.0
        %v142 = vmul.f32 %v140, %v141
        %v143 = vsub.f32 %v132, %v142
        %v144 = vmul.f32 %v143, %v143
        %145 = vadd.xlane.f32.xlu0 %v144
        %v146 = vpop.xlane.xlu0 %145
        %v147 = vrot.slane %v146, 4
        %v148 = vadd.f32 %v146, %v147
        %v149 = vrot.slane %v148, 2
        %v150 = vadd.f32 %v148, %v149
        %v151 = vrot.slane %v150, 1
        %v152 = vadd.f32 %v150, %v151
        %v153 = vrcp.pop 1023.0
        %v154 = vmul.f32 %v152, %v153
        %v155 = vrsqrt.pop %v154
        %v156 = vmul.f32 %v154, %v155
        %vm157 = vcmp.eq.f32.partialorder %v154, inf
        %v158 = vsel %vm157, %v154, %v156
        %vm159 = vcmp.eq.f32.partialorder %v154, 0.0
        %v160 = vand.u32 %v154, 2147483648
        %v161 = vsel %vm159, %v160, %v158
        %v162 = vadd.f32 %v161, 0.0001
        %v163 = vrcp.pop %v162
        %v164 = vmul.f32 %v143, %v163
        %165 = vst [vmem:[%s131] sm:$0xff] %v164
        %s166 = sand.u32 %s52, 1
        %s167 = scalar_lea.sflag [#allocation4], %s166
        %s168 = sand.u32 %s52, 1
        %s169 = smul.addr %s168, 8
        %s170 = scalar_lea.vmem [#allocation5], %s169
        // Predicated region
        $region29: #{tpu_custom_call.1} parent=23 // pred_check
          %p171 = pneg %p62
        $region30: #{tpu_custom_call.1} parent=23 // pred_check_branch
          %173 = sbr.rel (%p171) target = $region32
        $region31: #{tpu_custom_call.1} parent=23 // pred_region
          %s175 = ssub.s32 128, 128
          %176 = vsyncadd %s167, %s175
          %s177 = smul.addr %s18, 128
          %s178 = scalar_lea.hbm %s1, %s177
          %s180 = sshll.u32 %s170, 4
          %s181 = int_to_ptr.vmem [resolvable:$true] %s180
          %183 = dma.vmem_to_hbm [thread:$0]  %s181, 128, %s178, %s167
        $region32: #{tpu_custom_call.1} parent=23 // pred_fallthru
          _
      $region24: #{tpu_custom_call.1} parent=5 // pred_fallthru
        _
      %p184 = scmp.le.s32.totalorder 2, %s13
      // Predicated region
      $region33: #{tpu_custom_call.1} parent=5 // pred_check
        %p185 = pneg %p184
      $region34: #{tpu_custom_call.1} parent=5 // pred_check_branch
        %187 = sbr.rel (%p185) target = $region36
      $region35: #{tpu_custom_call.1} parent=5 // pred_region
        %s188 = ssub.s32 %s13, 2
        // Predicated region
        $region37: #{tpu_custom_call.1} parent=35 // pred_check
          %p189 = pneg %p68
        $region38: #{tpu_custom_call.1} parent=35 // pred_check_branch
          %191 = sbr.rel (%p189) target = $region40
        $region39: #{tpu_custom_call.1} parent=35 // pred_region
          %s192 = sand.u32 %s53, 1
          %s193 = scalar_lea.sflag [#allocation4], %s192
          %s194 = sand.u32 %s53, 1
          %s195 = smul.addr %s194, 8
          %s196 = scalar_lea.vmem [#allocation5], %s195
          %197 = dma.done %s193, 128
        $region40: #{tpu_custom_call.1} parent=35 // pred_fallthru
          _
      $region36: #{tpu_custom_call.1} parent=5 // pred_fallthru
        _
    $region6: #{tpu_custom_call.1} parent=1 // loop_footer
      %s17 = sadd.s32 1, %s13
    $region7: #{tpu_custom_call.1} parent=1 // loop_footer_branch
      %12 = sbr.rel target = $region3
    $region8: #{tpu_custom_call.1} parent=1 // loop_exit
      _
    %198 = vsyncpa [#allocation3], 1
    %s199 = scalar_lea.sflag [#allocation3], 1
    %200 = vsyncpa %s199, 1
    %201 = vsyncpa [#allocation4], 1
    %s202 = scalar_lea.sflag [#allocation4], 1
    %203 = vsyncpa %s202, 1

</llo_original>
